<compile_context>
chip_gen: v5e
topology: v5e:2x2
jax: 0.10.0
libtpu: 0.0.40
codegen_flags: <defaults>
</compile_context>

<pallas_src>
import functools
import math

import jax
import jax.numpy as jnp
from jax import lax
from jax.experimental import pallas as pl
from jax.experimental.pallas import tpu as pltpu

# ---- small configuration consistent with the module's forward ----
BATCH = 2
SEQ = 8            # num_tokens (<= context_length)
D_IN = 32
D_OUT = 32
NUM_HEADS = 4
HEAD_DIM = D_OUT // NUM_HEADS
DROPOUT_P = 0.0    # nn.Dropout(0.0) -> identity


def mha_kernel(x_ref, w_ref, o_ref, *, num_heads, batch, seq, d_in, d_out, fold):
    """Whole-problem kernel (no grid): the entire (tiny) MHA in one invocation.

    x_ref : (B*T, d_in)              pre-flattened activations, f32
    w_ref : (d_in + d_out + 1, 3*d_out) fused weight slab:
              rows [0, d_in)              -> [Wq | Wk | Wv]
              rows [d_in, d_in+d_out)     -> Wo   (cols [0, d_out), rest zero pad)
              row  d_in+d_out             -> b_o  (cols [0, d_out), rest zero pad)
    o_ref : (B*T // fold, fold*d_out)  lane-dense output slab (f32)
    """
    head_dim = d_out // num_heads
    bt = batch * seq
    bh = batch * num_heads

    # ---- fused QKV projection: one MXU matmul over all batch*seq rows ----
    x2d = x_ref[...]                                             # (BT, d_in)
    wqkv = w_ref[0:d_in, :]                                      # (d_in, 3*d_out)
    qkv = jnp.dot(x2d, wqkv, preferred_element_type=jnp.float32)  # (BT, 3*d_out)

    # ---- ONE relayout per tensor: (BT, [head|dim]) -> (B*H, T, head_dim) ----
    # Built from static lane slices + a leading-axis stack (no generic
    # reshape/transpose), so it lowers cleanly; done once, not per head.
    def to_heads(col0):
        parts = [
            qkv[:, col0 + h * head_dim:col0 + (h + 1) * head_dim]
            .reshape(batch, seq, head_dim)
            for h in range(num_heads)
        ]
        return jnp.stack(parts, axis=1).reshape(bh, seq, head_dim)

    scale = 1.0 / math.sqrt(head_dim)
    q = to_heads(0) * scale          # scale folded once into q, not into scores
    k = to_heads(d_out)
    v = to_heads(2 * d_out)

    # ---- causal mask as a hoisted additive bias (finite sentinel: no NaN) ----
    row = lax.broadcasted_iota(jnp.int32, (seq, seq), 0)
    col = lax.broadcasted_iota(jnp.int32, (seq, seq), 1)
    bias = jnp.where(col <= row, 0.0, -1e30).astype(jnp.float32)  # (T, T)

    # ---- ONE batched scores matmul / bias / softmax / ctx matmul over B*H ----
    s = jnp.einsum("bqd,bkd->bqk", q, k,
                   preferred_element_type=jnp.float32)            # (BH, T, T)
    s = s + bias[None, :, :]
    m = jnp.max(s, axis=-1, keepdims=True)
    p = jnp.exp(s - m)
    p = p * pl.reciprocal(jnp.sum(p, axis=-1, keepdims=True), approx=True)
    # TODO(synk): nn.Dropout on attn_weights omitted (p=0.0 / eval); training
    # parity would use pltpu.prng_seed + pltpu.prng_random_bits here.
    ctx = jnp.einsum("bqk,bkd->bqd", p, v,
                     preferred_element_type=jnp.float32)          # (BH, T, hd)

    # ---- reassemble heads once -> (BT, d_out), then ONE output projection ----
    ctx4 = ctx.reshape(batch, num_heads, seq, head_dim)
    ctx2d = jnp.concatenate([ctx4[:, h] for h in range(num_heads)],
                            axis=-1).reshape(bt, d_out)           # (BT, d_out)
    wo = w_ref[d_in:d_in + d_out, 0:d_out]                        # (d_out, d_out)
    bo = w_ref[d_in + d_out:d_in + d_out + 1, 0:d_out]            # (1, d_out)
    out = jnp.dot(ctx2d, wo, preferred_element_type=jnp.float32) + bo

    # ---- lane-dense store: fold `fold` consecutive rows into one 128-lane row ----
    if fold > 1:
        out3 = out.reshape(bt // fold, fold, d_out)
        out = jnp.concatenate([out3[:, j] for j in range(fold)], axis=-1)
    o_ref[...] = out.astype(o_ref.dtype)


def multi_headed_attention(x, wq, wk, wv, wo, bo):
    """x: (B, T, d_in); wq/wk/wv: (d_in, d_out); wo: (d_out, d_out); bo: (1, d_out).

    Weights are stored pre-transposed as (in, out) so y = x @ W (+ b) matches
    torch.nn.Linear. Returns (B, T, d_out) float32.
    """
    B, T, d_in = x.shape
    d_out = wq.shape[1]
    bt = B * T

    # Two input DMAs total: pre-flattened activations + one fused weight slab.
    x2d = x.reshape(bt, d_in).astype(jnp.float32)
    wqkv = jnp.concatenate([wq, wk, wv], axis=1)                   # (d_in, 3*d_out)
    wo_row = jnp.concatenate(
        [wo, jnp.zeros((d_out, 2 * d_out), jnp.float32)], axis=1)  # (d_out, 3*d_out)
    bo_row = jnp.concatenate(
        [bo, jnp.zeros((1, 2 * d_out), jnp.float32)], axis=1)      # (1, 3*d_out)
    w = jnp.concatenate([wqkv, wo_row, bo_row],
                        axis=0).astype(jnp.float32)                # (d_in+d_out+1, 3*d_out)

    # Lane-dense output slab when (BT, d_out) folds into full 128-lane rows.
    if d_out < 128 and 128 % d_out == 0 and bt % (128 // d_out) == 0:
        fold = 128 // d_out
    else:
        fold = 1
    out_shape = (bt // fold, fold * d_out)

    kernel = functools.partial(mha_kernel, num_heads=NUM_HEADS, batch=B, seq=T,
                               d_in=d_in, d_out=d_out, fold=fold)
    out = pl.pallas_call(
        kernel,
        out_shape=jax.ShapeDtypeStruct(out_shape, jnp.float32),
        # Whole (tiny) problem resident in VMEM for one invocation; no grid.
        in_specs=[
            pl.BlockSpec(memory_space=pltpu.MemorySpace.VMEM),   # x (flattened)
            pl.BlockSpec(memory_space=pltpu.MemorySpace.VMEM),   # fused weights
        ],
        out_specs=pl.BlockSpec(memory_space=pltpu.MemorySpace.VMEM),
    )(x2d, w)
    return out.reshape(B, T, d_out)


def _reference(x, wq, wk, wv, wo, bo, num_heads):
    """Pure-JAX reference mirroring the PyTorch forward (dropout = identity)."""
    B, T, _ = x.shape
    d_out = wq.shape[1]
    hd = d_out // num_heads
    q = (x @ wq).reshape(B, T, num_heads, hd).transpose(0, 2, 1, 3)
    k = (x @ wk).reshape(B, T, num_heads, hd).transpose(0, 2, 1, 3)
    v = (x @ wv).reshape(B, T, num_heads, hd).transpose(0, 2, 1, 3)
    s = jnp.einsum("bhqd,bhkd->bhqk", q, k)
    mask = jnp.triu(jnp.ones((T, T), bool), k=1)
    s = jnp.where(mask, -jnp.inf, s)
    attn = jax.nn.softmax(s / math.sqrt(hd), axis=-1)
    ctx = jnp.einsum("bhqk,bhkd->bhqd", attn, v)
    ctx = ctx.transpose(0, 2, 1, 3).reshape(B, T, d_out)
    return ctx @ wo + bo[0]


if __name__ == "__main__":
    key = jax.random.PRNGKey(0)
    kx, kq, kk, kv, ko, kb = jax.random.split(key, 6)

    lim_in = 1.0 / math.sqrt(D_IN)
    lim_out = 1.0 / math.sqrt(D_OUT)
    x = jax.random.normal(kx, (BATCH, SEQ, D_IN), jnp.float32)
    wq = jax.random.uniform(kq, (D_IN, D_OUT), jnp.float32, -lim_in, lim_in)
    wk = jax.random.uniform(kk, (D_IN, D_OUT), jnp.float32, -lim_in, lim_in)
    wv = jax.random.uniform(kv, (D_IN, D_OUT), jnp.float32, -lim_in, lim_in)
    wo = jax.random.uniform(ko, (D_OUT, D_OUT), jnp.float32, -lim_out, lim_out)
    bo = jax.random.uniform(kb, (1, D_OUT), jnp.float32, -lim_out, lim_out)

    out = jax.block_until_ready(multi_headed_attention(x, wq, wk, wv, wo, bo))
    assert out.shape == (BATCH, SEQ, D_OUT), out.shape

    ref = _reference(x, wq, wk, wv, wo, bo, NUM_HEADS)
    # Tolerance covers the EUP approximate reciprocal in the softmax denominator.
    assert jnp.allclose(out, ref, atol=2e-2, rtol=2e-2), \
        f"kernel mismatch vs reference, max|diff|={float(jnp.max(jnp.abs(out - ref)))}"

    print("KERNEL_OK")
</pallas_src>

<mosaic_0001>
module attributes {stable_mosaic.version = 11 : i64} {
  func.func @mha_kernel(%arg0: memref<16x32xf32, #tpu.memory_space<vmem>>, %arg1: memref<65x96xf32, #tpu.memory_space<vmem>>, %arg2: memref<4x128xf32, #tpu.memory_space<vmem>>) attributes {dimension_semantics = [], scalar_prefetch = 0 : i64, scratch_operands = 0 : i64, tpu.core_type = #tpu.core_type<tc>} {
    %c0 = arith.constant 0 : index
    %c0_0 = arith.constant 0 : index
    %0 = vector.load %arg0[%c0, %c0_0] : memref<16x32xf32, #tpu.memory_space<vmem>>, vector<16x32xf32>
    %c0_1 = arith.constant 0 : index
    %c0_2 = arith.constant 0 : index
    %1 = vector.load %arg1[%c0_1, %c0_2] : memref<65x96xf32, #tpu.memory_space<vmem>>, vector<32x96xf32>
    %cst = arith.constant dense<0.000000e+00> : vector<16x96xf32>
    %2 = tpu.matmul %0, %1, %cst {dimension_numbers = #tpu.dot_dimension_numbers<[1], [0], [0], [1], [0, 0, 1, 1], [], []>} : vector<16x32xf32>, vector<32x96xf32>, vector<16x96xf32> -> vector<16x96xf32>
    %3 = vector.extract_strided_slice %2 {offsets = [0, 0], sizes = [16, 8], strides = [1, 1]} : vector<16x96xf32> to vector<16x8xf32>
    %4 = vector.shape_cast %3 : vector<16x8xf32> to vector<2x8x8xf32>
    %5 = vector.extract_strided_slice %2 {offsets = [0, 8], sizes = [16, 8], strides = [1, 1]} : vector<16x96xf32> to vector<16x8xf32>
    %6 = vector.shape_cast %5 : vector<16x8xf32> to vector<2x8x8xf32>
    %7 = vector.extract_strided_slice %2 {offsets = [0, 16], sizes = [16, 8], strides = [1, 1]} : vector<16x96xf32> to vector<16x8xf32>
    %8 = vector.shape_cast %7 : vector<16x8xf32> to vector<2x8x8xf32>
    %9 = vector.extract_strided_slice %2 {offsets = [0, 24], sizes = [16, 8], strides = [1, 1]} : vector<16x96xf32> to vector<16x8xf32>
    %10 = vector.shape_cast %9 : vector<16x8xf32> to vector<2x8x8xf32>
    %11 = vector.shape_cast %4 : vector<2x8x8xf32> to vector<2x1x8x8xf32>
    %12 = vector.shape_cast %6 : vector<2x8x8xf32> to vector<2x1x8x8xf32>
    %13 = vector.shape_cast %8 : vector<2x8x8xf32> to vector<2x1x8x8xf32>
    %14 = vector.shape_cast %10 : vector<2x8x8xf32> to vector<2x1x8x8xf32>
    %15 = tpu.concatenate %11, %12, %13, %14 in 1 : vector<2x1x8x8xf32>, vector<2x1x8x8xf32>, vector<2x1x8x8xf32>, vector<2x1x8x8xf32> -> vector<2x4x8x8xf32>
    %16 = vector.shape_cast %15 : vector<2x4x8x8xf32> to vector<8x8x8xf32>
    %cst_3 = arith.constant 0.353553385 : f32
    %17 = vector.broadcast %cst_3 : f32 to vector<8x8x8xf32>
    %18 = arith.mulf %16, %17 : vector<8x8x8xf32>
    %19 = vector.extract_strided_slice %2 {offsets = [0, 32], sizes = [16, 8], strides = [1, 1]} : vector<16x96xf32> to vector<16x8xf32>
    %20 = vector.shape_cast %19 : vector<16x8xf32> to vector<2x8x8xf32>
    %21 = vector.extract_strided_slice %2 {offsets = [0, 40], sizes = [16, 8], strides = [1, 1]} : vector<16x96xf32> to vector<16x8xf32>
    %22 = vector.shape_cast %21 : vector<16x8xf32> to vector<2x8x8xf32>
    %23 = vector.extract_strided_slice %2 {offsets = [0, 48], sizes = [16, 8], strides = [1, 1]} : vector<16x96xf32> to vector<16x8xf32>
    %24 = vector.shape_cast %23 : vector<16x8xf32> to vector<2x8x8xf32>
    %25 = vector.extract_strided_slice %2 {offsets = [0, 56], sizes = [16, 8], strides = [1, 1]} : vector<16x96xf32> to vector<16x8xf32>
    %26 = vector.shape_cast %25 : vector<16x8xf32> to vector<2x8x8xf32>
    %27 = vector.shape_cast %20 : vector<2x8x8xf32> to vector<2x1x8x8xf32>
    %28 = vector.shape_cast %22 : vector<2x8x8xf32> to vector<2x1x8x8xf32>
    %29 = vector.shape_cast %24 : vector<2x8x8xf32> to vector<2x1x8x8xf32>
    %30 = vector.shape_cast %26 : vector<2x8x8xf32> to vector<2x1x8x8xf32>
    %31 = tpu.concatenate %27, %28, %29, %30 in 1 : vector<2x1x8x8xf32>, vector<2x1x8x8xf32>, vector<2x1x8x8xf32>, vector<2x1x8x8xf32> -> vector<2x4x8x8xf32>
    %32 = vector.shape_cast %31 : vector<2x4x8x8xf32> to vector<8x8x8xf32>
    %33 = vector.extract_strided_slice %2 {offsets = [0, 64], sizes = [16, 8], strides = [1, 1]} : vector<16x96xf32> to vector<16x8xf32>
    %34 = vector.shape_cast %33 : vector<16x8xf32> to vector<2x8x8xf32>
    %35 = vector.extract_strided_slice %2 {offsets = [0, 72], sizes = [16, 8], strides = [1, 1]} : vector<16x96xf32> to vector<16x8xf32>
    %36 = vector.shape_cast %35 : vector<16x8xf32> to vector<2x8x8xf32>
    %37 = vector.extract_strided_slice %2 {offsets = [0, 80], sizes = [16, 8], strides = [1, 1]} : vector<16x96xf32> to vector<16x8xf32>
    %38 = vector.shape_cast %37 : vector<16x8xf32> to vector<2x8x8xf32>
    %39 = vector.extract_strided_slice %2 {offsets = [0, 88], sizes = [16, 8], strides = [1, 1]} : vector<16x96xf32> to vector<16x8xf32>
    %40 = vector.shape_cast %39 : vector<16x8xf32> to vector<2x8x8xf32>
    %41 = vector.shape_cast %34 : vector<2x8x8xf32> to vector<2x1x8x8xf32>
    %42 = vector.shape_cast %36 : vector<2x8x8xf32> to vector<2x1x8x8xf32>
    %43 = vector.shape_cast %38 : vector<2x8x8xf32> to vector<2x1x8x8xf32>
    %44 = vector.shape_cast %40 : vector<2x8x8xf32> to vector<2x1x8x8xf32>
    %45 = tpu.concatenate %41, %42, %43, %44 in 1 : vector<2x1x8x8xf32>, vector<2x1x8x8xf32>, vector<2x1x8x8xf32>, vector<2x1x8x8xf32> -> vector<2x4x8x8xf32>
    %46 = vector.shape_cast %45 : vector<2x4x8x8xf32> to vector<8x8x8xf32>
    %47 = tpu.iota {dimensions = array<i32: 0>} : vector<8x8xi32>
    %48 = tpu.iota {dimensions = array<i32: 1>} : vector<8x8xi32>
    %49 = arith.cmpi sle, %48, %47 : vector<8x8xi32>
    %cst_4 = arith.constant 0.000000e+00 : f32
    %cst_5 = arith.constant -1.000000e+30 : f32
    %50 = vector.broadcast %cst_4 : f32 to vector<8x8xf32>
    %51 = vector.broadcast %cst_5 : f32 to vector<8x8xf32>
    %52 = arith.select %49, %50, %51 : vector<8x8xi1>, vector<8x8xf32>
    "tpu.trace_start"() <{level = 10 : i32, message = "bqd,bkd->bqk"}> : () -> ()
    %cst_6 = arith.constant dense<0.000000e+00> : vector<8x8x8xf32>
    %53 = tpu.matmul %18, %32, %cst_6 {dimension_numbers = #tpu.dot_dimension_numbers<[2], [2], [1], [1], [0, 0, 0, 1, 1, 1], [0], [0]>} : vector<8x8x8xf32>, vector<8x8x8xf32>, vector<8x8x8xf32> -> vector<8x8x8xf32>
    "tpu.trace_stop"() : () -> ()
    %54 = vector.shape_cast %52 : vector<8x8xf32> to vector<1x8x8xf32>
    %55 = vector.broadcast %54 : vector<1x8x8xf32> to vector<8x8x8xf32>
    %56 = arith.addf %53, %55 : vector<8x8x8xf32>
    %cst_7 = arith.constant dense<0xFF800000> : vector<8x8xf32>
    %57 = vector.multi_reduction <maximumf>, %56, %cst_7 [2] : vector<8x8x8xf32> to vector<8x8xf32>
    %58 = vector.shape_cast %57 : vector<8x8xf32> to vector<8x8x1xf32>
    %59 = vector.broadcast %58 : vector<8x8x1xf32> to vector<8x8x8xf32>
    %60 = arith.subf %56, %59 : vector<8x8x8xf32>
    %61 = math.exp %60 : vector<8x8x8xf32>
    %cst_8 = arith.constant dense<0.000000e+00> : vector<8x8xf32>
    %62 = vector.multi_reduction <add>, %61, %cst_8 [2] : vector<8x8x8xf32> to vector<8x8xf32>
    %63 = vector.shape_cast %62 : vector<8x8xf32> to vector<8x8x1xf32>
    %64 = tpu.reciprocal %63 {approx = true} : vector<8x8x1xf32> -> vector<8x8x1xf32>
    %65 = vector.broadcast %64 : vector<8x8x1xf32> to vector<8x8x8xf32>
    %66 = arith.mulf %61, %65 : vector<8x8x8xf32>
    "tpu.trace_start"() <{level = 10 : i32, message = "bqk,bkd->bqd"}> : () -> ()
    %cst_9 = arith.constant dense<0.000000e+00> : vector<8x8x8xf32>
    %67 = tpu.matmul %66, %46, %cst_9 {dimension_numbers = #tpu.dot_dimension_numbers<[2], [1], [1], [2], [0, 0, 0, 1, 1, 2], [0], [0]>} : vector<8x8x8xf32>, vector<8x8x8xf32>, vector<8x8x8xf32> -> vector<8x8x8xf32>
    "tpu.trace_stop"() : () -> ()
    %68 = vector.shape_cast %67 : vector<8x8x8xf32> to vector<2x4x8x8xf32>
    %69 = vector.extract_strided_slice %68 {offsets = [0, 0, 0, 0], sizes = [2, 1, 8, 8], strides = [1, 1, 1, 1]} : vector<2x4x8x8xf32> to vector<2x1x8x8xf32>
    %70 = vector.shape_cast %69 : vector<2x1x8x8xf32> to vector<2x8x8xf32>
    %71 = vector.extract_strided_slice %68 {offsets = [0, 1, 0, 0], sizes = [2, 1, 8, 8], strides = [1, 1, 1, 1]} : vector<2x4x8x8xf32> to vector<2x1x8x8xf32>
    %72 = vector.shape_cast %71 : vector<2x1x8x8xf32> to vector<2x8x8xf32>
    %73 = vector.extract_strided_slice %68 {offsets = [0, 2, 0, 0], sizes = [2, 1, 8, 8], strides = [1, 1, 1, 1]} : vector<2x4x8x8xf32> to vector<2x1x8x8xf32>
    %74 = vector.shape_cast %73 : vector<2x1x8x8xf32> to vector<2x8x8xf32>
    %75 = vector.extract_strided_slice %68 {offsets = [0, 3, 0, 0], sizes = [2, 1, 8, 8], strides = [1, 1, 1, 1]} : vector<2x4x8x8xf32> to vector<2x1x8x8xf32>
    %76 = vector.shape_cast %75 : vector<2x1x8x8xf32> to vector<2x8x8xf32>
    %77 = tpu.concatenate %70, %72, %74, %76 in 2 : vector<2x8x8xf32>, vector<2x8x8xf32>, vector<2x8x8xf32>, vector<2x8x8xf32> -> vector<2x8x32xf32>
    %78 = vector.shape_cast %77 : vector<2x8x32xf32> to vector<16x32xf32>
    %c32 = arith.constant 32 : index
    %c0_10 = arith.constant 0 : index
    %79 = vector.load %arg1[%c32, %c0_10] : memref<65x96xf32, #tpu.memory_space<vmem>>, vector<32x32xf32>
    %c64 = arith.constant 64 : index
    %c0_11 = arith.constant 0 : index
    %80 = vector.load %arg1[%c64, %c0_11] : memref<65x96xf32, #tpu.memory_space<vmem>>, vector<1x32xf32>
    %cst_12 = arith.constant dense<0.000000e+00> : vector<16x32xf32>
    %81 = tpu.matmul %78, %79, %cst_12 {dimension_numbers = #tpu.dot_dimension_numbers<[1], [0], [0], [1], [0, 0, 1, 1], [], []>} : vector<16x32xf32>, vector<32x32xf32>, vector<16x32xf32> -> vector<16x32xf32>
    %82 = vector.broadcast %80 : vector<1x32xf32> to vector<16x32xf32>
    %83 = arith.addf %81, %82 : vector<16x32xf32>
    %84 = vector.shape_cast %83 : vector<16x32xf32> to vector<4x4x32xf32>
    %85 = vector.extract_strided_slice %84 {offsets = [0, 0, 0], sizes = [4, 1, 32], strides = [1, 1, 1]} : vector<4x4x32xf32> to vector<4x1x32xf32>
    %86 = vector.shape_cast %85 : vector<4x1x32xf32> to vector<4x32xf32>
    %87 = vector.extract_strided_slice %84 {offsets = [0, 1, 0], sizes = [4, 1, 32], strides = [1, 1, 1]} : vector<4x4x32xf32> to vector<4x1x32xf32>
    %88 = vector.shape_cast %87 : vector<4x1x32xf32> to vector<4x32xf32>
    %89 = vector.extract_strided_slice %84 {offsets = [0, 2, 0], sizes = [4, 1, 32], strides = [1, 1, 1]} : vector<4x4x32xf32> to vector<4x1x32xf32>
    %90 = vector.shape_cast %89 : vector<4x1x32xf32> to vector<4x32xf32>
    %91 = vector.extract_strided_slice %84 {offsets = [0, 3, 0], sizes = [4, 1, 32], strides = [1, 1, 1]} : vector<4x4x32xf32> to vector<4x1x32xf32>
    %92 = vector.shape_cast %91 : vector<4x1x32xf32> to vector<4x32xf32>
    %93 = tpu.concatenate %86, %88, %90, %92 in 1 : vector<4x32xf32>, vector<4x32xf32>, vector<4x32xf32>, vector<4x32xf32> -> vector<4x128xf32>
    %c0_13 = arith.constant 0 : index
    %c0_14 = arith.constant 0 : index
    %94 = vector.load %arg2[%c0_13, %c0_14] : memref<4x128xf32, #tpu.memory_space<vmem>>, vector<4x128xf32>
    tpu.vector_store %arg2[%c0_13, %c0_14], %93 {strides = array<i32>} : memref<4x128xf32, #tpu.memory_space<vmem>>, vector<4x128xf32>,
    return
  }
}

</mosaic_0001>

<llo_original>
// kernel: tpu_custom_call.1
$region0: #{tpu_custom_call.1}
  #allocation0 [shape = 'u32[]', space=smem, size = 0x4, offset = 0x4, fixed_abs, tag = 'smem constant byte address 0x4 - core index']
  #allocation1 [shape = 'u32[72,128]{1,0:T(1,128)}', space=vmem, size = 0x9000, scoped, tag = 'internal scratch']
  %s0 = inlined_call_operand.hbm [shape: f32[16,32], index: 0, kind: input, shape index: {}]
  %s1 = inlined_call_operand.hbm [shape: f32[65,96], index: 1, kind: input, shape index: {}]
  %s2 = inlined_call_operand.hbm [shape: f32[4,128], index: 2, kind: output, shape index: {}]
  %s3 = sld [smem:[#allocation0]]
  $region26: #{tpu_custom_call.1} parent=0
    _
  %s5 = ssub.s32 1, %s3
  %s6 = scalar_select 0, %s5, %s3
  $region1: #{tpu_custom_call.1} parent=0
    #allocation2 [shape = 'u8[8192]{0}', space=vmem, size = 0x2000, scoped, tag = 'input window, operand 0, single buffered']
    #allocation3 [shape = 's32[1]{0}', space=sflag, size = 0x4, scoped, tag = 'scoped memory for tpu_custom_call.1']
    #allocation4 [shape = 's32[1]{0}', space=sflag, size = 0x4, scoped, tag = 'scoped memory for tpu_custom_call.1']
    #allocation5 [shape = 'u8[36864]{0}', space=vmem, size = 0x9000, scoped, tag = 'input window, operand 1, single buffered']
    #allocation6 [shape = 's32[1]{0}', space=sflag, size = 0x4, scoped, tag = 'scoped memory for tpu_custom_call.1']
    #allocation7 [shape = 'u8[2048]{0}', space=vmem, size = 0x800, scoped, tag = 'output window, operand 0, single buffered']
    %7 = vsyncpa [#allocation3], 0
    %8 = vsyncpa [#allocation6], 0
    %9 = vsyncpa [#allocation4], 0
    // Predicated region
    $region2: #{tpu_custom_call.1} parent=1 // pred_check
      _
    $region3: #{tpu_custom_call.1} parent=1 // pred_check_branch
      %11 = sbr.rel (0) target = $region5
    $region4: #{tpu_custom_call.1} parent=1 // pred_region
      %13 = vsyncadd [#allocation3], 0
      %s14 = sshll.u32 %s0, 4
      %s15 = int_to_ptr.hbm [resolvable:$true] %s14
      %s16 = sshll.u32 [#allocation2], 4
      %s17 = int_to_ptr.vmem [resolvable:$true] %s16
      %22 = dma.hbm_to_vmem [thread:$0]  %s15, 256, %s17, [#allocation3], 128, 128, 8
    $region5: #{tpu_custom_call.1} parent=1 // pred_fallthru
      _
    // Predicated region
    $region6: #{tpu_custom_call.1} parent=1 // pred_check
      _
    $region7: #{tpu_custom_call.1} parent=1 // pred_check_branch
      %24 = sbr.rel (0) target = $region9
    $region8: #{tpu_custom_call.1} parent=1 // pred_region
      %26 = vsyncadd [#allocation6], 0
      %s27 = sshll.u32 %s1, 4
      %s28 = int_to_ptr.hbm [resolvable:$true] %s27
      %s29 = sshll.u32 [#allocation5], 4
      %s30 = int_to_ptr.vmem [resolvable:$true] %s29
      %35 = dma.hbm_to_vmem [thread:$0]  %s28, 1152, %s30, [#allocation6], 128, 128, 8
    $region9: #{tpu_custom_call.1} parent=1 // pred_fallthru
      _
    // Predicated region
    $region10: #{tpu_custom_call.1} parent=1 // pred_check
      _
    $region11: #{tpu_custom_call.1} parent=1 // pred_check_branch
      %37 = sbr.rel (0) target = $region13
    $region12: #{tpu_custom_call.1} parent=1 // pred_region
      %39 = dma.done [#allocation3], 256
    $region13: #{tpu_custom_call.1} parent=1 // pred_fallthru
      _
    // Predicated region
    $region14: #{tpu_custom_call.1} parent=1 // pred_check
      _
    $region15: #{tpu_custom_call.1} parent=1 // pred_check_branch
      %41 = sbr.rel (0) target = $region17
    $region16: #{tpu_custom_call.1} parent=1 // pred_region
      %43 = dma.done [#allocation6], 1152
    $region17: #{tpu_custom_call.1} parent=1 // pred_fallthru
      _
    %v44 = vld [vmem:[#allocation2] sm:$0xff]
    %v45 = vld [vmem:[#allocation2 + $0x8] sm:$0xff]
    %v46 = vld [vmem:[#allocation5] sm:$0xff]
    %v47 = vld [vmem:[#allocation5 + $0x8] sm:$0xff]
    %v48 = vld [vmem:[#allocation5 + $0x10] sm:$0xff]
    %v49 = vld [vmem:[#allocation5 + $0x18] sm:$0xff]
    %vm50 = vcmask 261120
    %v52 = vsel %vm50, %v44, 0
    %v55 = vsel %vm50, %v45, 0
    %57 = vmatpush.msra.mxu0 0.0
    %58 = vmatpush.msra.mxu0 0.0
    %59 = vmatpush.msra.mxu0 0.0
    %60 = vmatpush.msra.mxu0 0.0
    %61 = vmatpush.msra.mxu0 0.0
    %62 = vmatpush.msra.mxu0 0.0
    %63 = vmatpush.msra.mxu0 0.0
    %64 = vmatpush.msra.mxu0 0.0
    %65 = vmatpush.msra.mxu0 0.0
    %66 = vmatpush.msra.mxu0 0.0
    %67 = vmatpush.msra.mxu0 0.0
    %68 = vmatpush.msra.mxu0 0.0
    %69 = vmatpush.msra.mxu0 %v49
    %70 = vmatpush.msra.mxu0 %v48
    %71 = vmatpush.msra.mxu0 %v47
    %72 = vmatpush.msra.mxu0 %v46
    %73 = vmatmul.f32.gmra.mxu0 %v52
    %v74 = vpop.f32.mrf.mxu0
    %v75 = vadd.f32 0.0, %v74
    %76 = vmatmul.f32.gmra.mxu0 %v55
    %v77 = vpop.f32.mrf.mxu0
    %v78 = vadd.f32 0.0, %v77
    %79 = vdwg.mxu0
    %82 = vrot.lane.b32.xlu0 %v75, 120
    %v83 = vpop.permute.xlu0 %82
    %84 = vrot.lane.b32.xlu0 %v78, 120
    %v85 = vpop.permute.xlu0 %84
    %88 = vrot.lane.b32.xlu0 %v75, 112
    %v89 = vpop.permute.xlu0 %88
    %90 = vrot.lane.b32.xlu0 %v78, 112
    %v91 = vpop.permute.xlu0 %90
    %94 = vrot.lane.b32.xlu0 %v75, 104
    %v95 = vpop.permute.xlu0 %94
    %96 = vrot.lane.b32.xlu0 %v78, 104
    %v97 = vpop.permute.xlu0 %96
    %v100 = vmul.f32 %v75, 0.35355338
    %v101 = vmul.f32 %v83, 0.35355338
    %v102 = vmul.f32 %v89, 0.35355338
    %v103 = vmul.f32 %v95, 0.35355338
    %v104 = vmul.f32 %v78, 0.35355338
    %v105 = vmul.f32 %v85, 0.35355338
    %v106 = vmul.f32 %v91, 0.35355338
    %v107 = vmul.f32 %v97, 0.35355338
    %v108 = vlaneseq
    %v109 = vshrl.u32 %v108, 7
    %v110 = vlaneseq
    %v111 = vand.u32 %v110, 127
    %vm112 = vcmp.le.s32.totalorder %v111, %v109
    %v113 = vsel %vm112, 0.0, -1e+30
    %114 = vrot.lane.b32.xlu0 %v75, 96
    %v115 = vpop.permute.xlu0 %114
    %vm116 = vcmask 64512
    %v118 = vsel %vm116, %v100, 0
    %v120 = vsel %vm116, %v115, 0
    %122 = vmatpush.xpose.msra.mxu0 0.0
    %123 = vmatpush.xpose.msra.mxu0 0.0
    %124 = vmatpush.xpose.msra.mxu0 0.0
    %125 = vmatpush.xpose.msra.mxu0 0.0
    %126 = vmatpush.xpose.msra.mxu0 0.0
    %127 = vmatpush.xpose.msra.mxu0 0.0
    %128 = vmatpush.xpose.msra.mxu0 0.0
    %129 = vmatpush.xpose.msra.mxu0 0.0
    %130 = vmatpush.xpose.msra.mxu0 0.0
    %131 = vmatpush.xpose.msra.mxu0 0.0
    %132 = vmatpush.xpose.msra.mxu0 0.0
    %133 = vmatpush.xpose.msra.mxu0 0.0
    %134 = vmatpush.xpose.msra.mxu0 0.0
    %135 = vmatpush.xpose.msra.mxu0 0.0
    %136 = vmatpush.xpose.msra.mxu0 0.0
    %137 = vmatpush.xpose.msra.mxu0 %v120
    %138 = vmatmul.f32.gmra.mxu0 %v118
    %v139 = vpop.f32.mrf.mxu0
    %v140 = vadd.f32 %v113, %v139
    %141 = vdwg.mxu0
    %142 = vrot.lane.b32.xlu0 %v83, 96
    %v143 = vpop.permute.xlu0 %142
    %v145 = vsel %vm116, %v101, 0
    %v147 = vsel %vm116, %v143, 0
    %149 = vmatpush.xpose.msra.mxu0 0.0
    %150 = vmatpush.xpose.msra.mxu0 0.0
    %151 = vmatpush.xpose.msra.mxu0 0.0
    %152 = vmatpush.xpose.msra.mxu0 0.0
    %153 = vmatpush.xpose.msra.mxu0 0.0
    %154 = vmatpush.xpose.msra.mxu0 0.0
    %155 = vmatpush.xpose.msra.mxu0 0.0
    %156 = vmatpush.xpose.msra.mxu0 0.0
    %157 = vmatpush.xpose.msra.mxu0 0.0
    %158 = vmatpush.xpose.msra.mxu0 0.0
    %159 = vmatpush.xpose.msra.mxu0 0.0
    %160 = vmatpush.xpose.msra.mxu0 0.0
    %161 = vmatpush.xpose.msra.mxu0 0.0
    %162 = vmatpush.xpose.msra.mxu0 0.0
    %163 = vmatpush.xpose.msra.mxu0 0.0
    %164 = vmatpush.xpose.msra.mxu0 %v147
    %165 = vmatmul.f32.gmra.mxu0 %v145
    %v166 = vpop.f32.mrf.mxu0
    %v167 = vadd.f32 %v113, %v166
    %168 = vdwg.mxu0
    %169 = vrot.lane.b32.xlu0 %v89, 96
    %v170 = vpop.permute.xlu0 %169
    %v172 = vsel %vm116, %v102, 0
    %v174 = vsel %vm116, %v170, 0
    %176 = vmatpush.xpose.msra.mxu0 0.0
    %177 = vmatpush.xpose.msra.mxu0 0.0
    %178 = vmatpush.xpose.msra.mxu0 0.0
    %179 = vmatpush.xpose.msra.mxu0 0.0
    %180 = vmatpush.xpose.msra.mxu0 0.0
    %181 = vmatpush.xpose.msra.mxu0 0.0
    %182 = vmatpush.xpose.msra.mxu0 0.0
    %183 = vmatpush.xpose.msra.mxu0 0.0
    %184 = vmatpush.xpose.msra.mxu0 0.0
    %185 = vmatpush.xpose.msra.mxu0 0.0
    %186 = vmatpush.xpose.msra.mxu0 0.0
    %187 = vmatpush.xpose.msra.mxu0 0.0
    %188 = vmatpush.xpose.msra.mxu0 0.0
    %189 = vmatpush.xpose.msra.mxu0 0.0
    %190 = vmatpush.xpose.msra.mxu0 0.0
    %191 = vmatpush.xpose.msra.mxu0 %v174
    %192 = vmatmul.f32.gmra.mxu0 %v172
    %v193 = vpop.f32.mrf.mxu0
    %v194 = vadd.f32 %v113, %v193
    %195 = vdwg.mxu0
    %196 = vrot.lane.b32.xlu0 %v95, 96
    %v197 = vpop.permute.xlu0 %196
    %v199 = vsel %vm116, %v103, 0
    %v201 = vsel %vm116, %v197, 0
    %203 = vmatpush.xpose.msra.mxu0 0.0
    %204 = vmatpush.xpose.msra.mxu0 0.0
    %205 = vmatpush.xpose.msra.mxu0 0.0
    %206 = vmatpush.xpose.msra.mxu0 0.0
    %207 = vmatpush.xpose.msra.mxu0 0.0
    %208 = vmatpush.xpose.msra.mxu0 0.0
    %209 = vmatpush.xpose.msra.mxu0 0.0
    %210 = vmatpush.xpose.msra.mxu0 0.0
    %211 = vmatpush.xpose.msra.mxu0 0.0
    %212 = vmatpush.xpose.msra.mxu0 0.0
    %213 = vmatpush.xpose.msra.mxu0 0.0
    %214 = vmatpush.xpose.msra.mxu0 0.0
    %215 = vmatpush.xpose.msra.mxu0 0.0
    %216 = vmatpush.xpose.msra.mxu0 0.0
    %217 = vmatpush.xpose.msra.mxu0 0.0
    %218 = vmatpush.xpose.msra.mxu0 %v201
    %219 = vmatmul.f32.gmra.mxu0 %v199
    %v220 = vpop.f32.mrf.mxu0
    %v221 = vadd.f32 %v113, %v220
    %222 = vdwg.mxu0
    %223 = vrot.lane.b32.xlu0 %v78, 96
    %v224 = vpop.permute.xlu0 %223
    %v226 = vsel %vm116, %v104, 0
    %v228 = vsel %vm116, %v224, 0
    %230 = vmatpush.xpose.msra.mxu0 0.0
    %231 = vmatpush.xpose.msra.mxu0 0.0
    %232 = vmatpush.xpose.msra.mxu0 0.0
    %233 = vmatpush.xpose.msra.mxu0 0.0
    %234 = vmatpush.xpose.msra.mxu0 0.0
    %235 = vmatpush.xpose.msra.mxu0 0.0
    %236 = vmatpush.xpose.msra.mxu0 0.0
    %237 = vmatpush.xpose.msra.mxu0 0.0
    %238 = vmatpush.xpose.msra.mxu0 0.0
    %239 = vmatpush.xpose.msra.mxu0 0.0
    %240 = vmatpush.xpose.msra.mxu0 0.0
    %241 = vmatpush.xpose.msra.mxu0 0.0
    %242 = vmatpush.xpose.msra.mxu0 0.0
    %243 = vmatpush.xpose.msra.mxu0 0.0
    %244 = vmatpush.xpose.msra.mxu0 0.0
    %245 = vmatpush.xpose.msra.mxu0 %v228
    %246 = vmatmul.f32.gmra.mxu0 %v226
    %v247 = vpop.f32.mrf.mxu0
    %v248 = vadd.f32 %v113, %v247
    %249 = vdwg.mxu0
    %250 = vrot.lane.b32.xlu0 %v85, 96
    %v251 = vpop.permute.xlu0 %250
    %v253 = vsel %vm116, %v105, 0
    %v255 = vsel %vm116, %v251, 0
    %257 = vmatpush.xpose.msra.mxu0 0.0
    %258 = vmatpush.xpose.msra.mxu0 0.0
    %259 = vmatpush.xpose.msra.mxu0 0.0
    %260 = vmatpush.xpose.msra.mxu0 0.0
    %261 = vmatpush.xpose.msra.mxu0 0.0
    %262 = vmatpush.xpose.msra.mxu0 0.0
    %263 = vmatpush.xpose.msra.mxu0 0.0
    %264 = vmatpush.xpose.msra.mxu0 0.0
    %265 = vmatpush.xpose.msra.mxu0 0.0
    %266 = vmatpush.xpose.msra.mxu0 0.0
    %267 = vmatpush.xpose.msra.mxu0 0.0
    %268 = vmatpush.xpose.msra.mxu0 0.0
    %269 = vmatpush.xpose.msra.mxu0 0.0
    %270 = vmatpush.xpose.msra.mxu0 0.0
    %271 = vmatpush.xpose.msra.mxu0 0.0
    %272 = vmatpush.xpose.msra.mxu0 %v255
    %273 = vmatmul.f32.gmra.mxu0 %v253
    %v274 = vpop.f32.mrf.mxu0
    %v275 = vadd.f32 %v113, %v274
    %276 = vdwg.mxu0
    %277 = vrot.lane.b32.xlu0 %v91, 96
    %v278 = vpop.permute.xlu0 %277
    %v280 = vsel %vm116, %v106, 0
    %v282 = vsel %vm116, %v278, 0
    %284 = vmatpush.xpose.msra.mxu0 0.0
    %285 = vmatpush.xpose.msra.mxu0 0.0
    %286 = vmatpush.xpose.msra.mxu0 0.0
    %287 = vmatpush.xpose.msra.mxu0 0.0
    %288 = vmatpush.xpose.msra.mxu0 0.0
    %289 = vmatpush.xpose.msra.mxu0 0.0
    %290 = vmatpush.xpose.msra.mxu0 0.0
    %291 = vmatpush.xpose.msra.mxu0 0.0
    %292 = vmatpush.xpose.msra.mxu0 0.0
    %293 = vmatpush.xpose.msra.mxu0 0.0
    %294 = vmatpush.xpose.msra.mxu0 0.0
    %295 = vmatpush.xpose.msra.mxu0 0.0
    %296 = vmatpush.xpose.msra.mxu0 0.0
    %297 = vmatpush.xpose.msra.mxu0 0.0
    %298 = vmatpush.xpose.msra.mxu0 0.0
    %299 = vmatpush.xpose.msra.mxu0 %v282
    %300 = vmatmul.f32.gmra.mxu0 %v280
    %v301 = vpop.f32.mrf.mxu0
    %v302 = vadd.f32 %v113, %v301
    %303 = vdwg.mxu0
    %304 = vrot.lane.b32.xlu0 %v97, 96
    %v305 = vpop.permute.xlu0 %304
    %v307 = vsel %vm116, %v107, 0
    %v309 = vsel %vm116, %v305, 0
    %311 = vmatpush.xpose.msra.mxu0 0.0
    %312 = vmatpush.xpose.msra.mxu0 0.0
    %313 = vmatpush.xpose.msra.mxu0 0.0
    %314 = vmatpush.xpose.msra.mxu0 0.0
    %315 = vmatpush.xpose.msra.mxu0 0.0
    %316 = vmatpush.xpose.msra.mxu0 0.0
    %317 = vmatpush.xpose.msra.mxu0 0.0
    %318 = vmatpush.xpose.msra.mxu0 0.0
    %319 = vmatpush.xpose.msra.mxu0 0.0
    %320 = vmatpush.xpose.msra.mxu0 0.0
    %321 = vmatpush.xpose.msra.mxu0 0.0
    %322 = vmatpush.xpose.msra.mxu0 0.0
    %323 = vmatpush.xpose.msra.mxu0 0.0
    %324 = vmatpush.xpose.msra.mxu0 0.0
    %325 = vmatpush.xpose.msra.mxu0 0.0
    %326 = vmatpush.xpose.msra.mxu0 %v309
    %327 = vmatmul.f32.gmra.mxu0 %v307
    %v328 = vpop.f32.mrf.mxu0
    %v329 = vadd.f32 %v113, %v328
    %330 = vdwg.mxu0
    %v331 = vsel %vm116, %v140, -inf
    %332 = vmax.xlane.f32.xlu0 %v331
    %v333 = vpop.xlane.xlu0 %332
    %v334 = vsel %vm116, %v167, -inf
    %335 = vmax.xlane.f32.xlu0 %v334
    %v336 = vpop.xlane.xlu0 %335
    %v337 = vsel %vm116, %v194, -inf
    %338 = vmax.xlane.f32.xlu0 %v337
    %v339 = vpop.xlane.xlu0 %338
    %v340 = vsel %vm116, %v221, -inf
    %341 = vmax.xlane.f32.xlu0 %v340
    %v342 = vpop.xlane.xlu0 %341
    %v343 = vsel %vm116, %v248, -inf
    %344 = vmax.xlane.f32.xlu0 %v343
    %v345 = vpop.xlane.xlu0 %344
    %v346 = vsel %vm116, %v275, -inf
    %347 = vmax.xlane.f32.xlu0 %v346
    %v348 = vpop.xlane.xlu0 %347
    %v349 = vsel %vm116, %v302, -inf
    %350 = vmax.xlane.f32.xlu0 %v349
    %v351 = vpop.xlane.xlu0 %350
    %v352 = vsel %vm116, %v329, -inf
    %353 = vmax.xlane.f32.xlu0 %v352
    %v354 = vpop.xlane.xlu0 %353
    %v355 = vsub.f32 %v140, %v333
    %v356 = vsub.f32 %v167, %v336
    %v357 = vsub.f32 %v194, %v339
    %v358 = vsub.f32 %v221, %v342
    %v359 = vsub.f32 %v248, %v345
    %v360 = vsub.f32 %v275, %v348
    %v361 = vsub.f32 %v302, %v351
    %v362 = vsub.f32 %v329, %v354
    %v363 = vmul.f32 %v355, 1.442695
    %v364 = vpow.pop %v363
    %v365 = vmul.f32 %v356, 1.442695
    %v366 = vpow.pop %v365
    %v367 = vmul.f32 %v357, 1.442695
    %v368 = vpow.pop %v367
    %v369 = vmul.f32 %v358, 1.442695
    %v370 = vpow.pop %v369
    %v371 = vmul.f32 %v359, 1.442695
    %v372 = vpow.pop %v371
    %v373 = vmul.f32 %v360, 1.442695
    %v374 = vpow.pop %v373
    %v375 = vmul.f32 %v361, 1.442695
    %v376 = vpow.pop %v375
    %v377 = vmul.f32 %v362, 1.442695
    %v378 = vpow.pop %v377
    %v379 = vsel %vm116, %v364, 0.0
    %380 = vadd.xlane.f32.xlu0 %v379
    %v381 = vpop.xlane.xlu0 %380
    %v382 = vsel %vm116, %v366, 0.0
    %383 = vadd.xlane.f32.xlu0 %v382
    %v384 = vpop.xlane.xlu0 %383
    %v385 = vsel %vm116, %v368, 0.0
    %386 = vadd.xlane.f32.xlu0 %v385
    %v387 = vpop.xlane.xlu0 %386
    %v388 = vsel %vm116, %v370, 0.0
    %389 = vadd.xlane.f32.xlu0 %v388
    %v390 = vpop.xlane.xlu0 %389
    %v391 = vsel %vm116, %v372, 0.0
    %392 = vadd.xlane.f32.xlu0 %v391
    %v393 = vpop.xlane.xlu0 %392
    %v394 = vsel %vm116, %v374, 0.0
    %395 = vadd.xlane.f32.xlu0 %v394
    %v396 = vpop.xlane.xlu0 %395
    %v397 = vsel %vm116, %v376, 0.0
    %398 = vadd.xlane.f32.xlu0 %v397
    %v399 = vpop.xlane.xlu0 %398
    %v400 = vsel %vm116, %v378, 0.0
    %401 = vadd.xlane.f32.xlu0 %v400
    %v402 = vpop.xlane.xlu0 %401
    %v403 = vrcp.pop %v381
    %v404 = vrcp.pop %v384
    %v405 = vrcp.pop %v387
    %v406 = vrcp.pop %v390
    %v407 = vrcp.pop %v393
    %v408 = vrcp.pop %v396
    %v409 = vrcp.pop %v399
    %v410 = vrcp.pop %v402
    %v411 = vmul.f32 %v364, %v403
    %v412 = vmul.f32 %v366, %v404
    %v413 = vmul.f32 %v368, %v405
    %v414 = vmul.f32 %v370, %v406
    %v415 = vmul.f32 %v372, %v407
    %v416 = vmul.f32 %v374, %v408
    %v417 = vmul.f32 %v376, %v409
    %v418 = vmul.f32 %v378, %v410
    %419 = vrot.lane.b32.xlu0 %v75, 64
    %v420 = vpop.permute.xlu0 %419
    %v423 = vsel %vm116, %v411, 0
    %425 = vmatpush.msra.mxu0 0.0
    %426 = vmatpush.msra.mxu0 0.0
    %427 = vmatpush.msra.mxu0 0.0
    %428 = vmatpush.msra.mxu0 0.0
    %429 = vmatpush.msra.mxu0 0.0
    %430 = vmatpush.msra.mxu0 0.0
    %431 = vmatpush.msra.mxu0 0.0
    %432 = vmatpush.msra.mxu0 0.0
    %433 = vmatpush.msra.mxu0 0.0
    %434 = vmatpush.msra.mxu0 0.0
    %435 = vmatpush.msra.mxu0 0.0
    %436 = vmatpush.msra.mxu0 0.0
    %437 = vmatpush.msra.mxu0 0.0
    %438 = vmatpush.msra.mxu0 0.0
    %439 = vmatpush.msra.mxu0 0.0
    %440 = vmatpush.msra.mxu0 %v420
    %441 = vmatmul.f32.gmra.mxu0 %v423
    %v442 = vpop.f32.mrf.mxu0
    %v443 = vadd.f32 0.0, %v442
    %444 = vdwg.mxu0
    %445 = vrot.lane.b32.xlu0 %v83, 64
    %v446 = vpop.permute.xlu0 %445
    %v449 = vsel %vm116, %v412, 0
    %451 = vmatpush.msra.mxu0 0.0
    %452 = vmatpush.msra.mxu0 0.0
    %453 = vmatpush.msra.mxu0 0.0
    %454 = vmatpush.msra.mxu0 0.0
    %455 = vmatpush.msra.mxu0 0.0
    %456 = vmatpush.msra.mxu0 0.0
    %457 = vmatpush.msra.mxu0 0.0
    %458 = vmatpush.msra.mxu0 0.0
    %459 = vmatpush.msra.mxu0 0.0
    %460 = vmatpush.msra.mxu0 0.0
    %461 = vmatpush.msra.mxu0 0.0
    %462 = vmatpush.msra.mxu0 0.0
    %463 = vmatpush.msra.mxu0 0.0
    %464 = vmatpush.msra.mxu0 0.0
    %465 = vmatpush.msra.mxu0 0.0
    %466 = vmatpush.msra.mxu0 %v446
    %467 = vmatmul.f32.gmra.mxu0 %v449
    %v468 = vpop.f32.mrf.mxu0
    %v469 = vadd.f32 0.0, %v468
    %470 = vdwg.mxu0
    %471 = vrot.lane.b32.xlu0 %v89, 64
    %v472 = vpop.permute.xlu0 %471
    %v475 = vsel %vm116, %v413, 0
    %477 = vmatpush.msra.mxu0 0.0
    %478 = vmatpush.msra.mxu0 0.0
    %479 = vmatpush.msra.mxu0 0.0
    %480 = vmatpush.msra.mxu0 0.0
    %481 = vmatpush.msra.mxu0 0.0
    %482 = vmatpush.msra.mxu0 0.0
    %483 = vmatpush.msra.mxu0 0.0
    %484 = vmatpush.msra.mxu0 0.0
    %485 = vmatpush.msra.mxu0 0.0
    %486 = vmatpush.msra.mxu0 0.0
    %487 = vmatpush.msra.mxu0 0.0
    %488 = vmatpush.msra.mxu0 0.0
    %489 = vmatpush.msra.mxu0 0.0
    %490 = vmatpush.msra.mxu0 0.0
    %491 = vmatpush.msra.mxu0 0.0
    %492 = vmatpush.msra.mxu0 %v472
    %493 = vmatmul.f32.gmra.mxu0 %v475
    %v494 = vpop.f32.mrf.mxu0
    %v495 = vadd.f32 0.0, %v494
    %496 = vdwg.mxu0
    %497 = vrot.lane.b32.xlu0 %v95, 64
    %v498 = vpop.permute.xlu0 %497
    %v501 = vsel %vm116, %v414, 0
    %503 = vmatpush.msra.mxu0 0.0
    %504 = vmatpush.msra.mxu0 0.0
    %505 = vmatpush.msra.mxu0 0.0
    %506 = vmatpush.msra.mxu0 0.0
    %507 = vmatpush.msra.mxu0 0.0
    %508 = vmatpush.msra.mxu0 0.0
    %509 = vmatpush.msra.mxu0 0.0
    %510 = vmatpush.msra.mxu0 0.0
    %511 = vmatpush.msra.mxu0 0.0
    %512 = vmatpush.msra.mxu0 0.0
    %513 = vmatpush.msra.mxu0 0.0
    %514 = vmatpush.msra.mxu0 0.0
    %515 = vmatpush.msra.mxu0 0.0
    %516 = vmatpush.msra.mxu0 0.0
    %517 = vmatpush.msra.mxu0 0.0
    %518 = vmatpush.msra.mxu0 %v498
    %519 = vmatmul.f32.gmra.mxu0 %v501
    %v520 = vpop.f32.mrf.mxu0
    %v521 = vadd.f32 0.0, %v520
    %522 = vdwg.mxu0
    %523 = vrot.lane.b32.xlu0 %v78, 64
    %v524 = vpop.permute.xlu0 %523
    %v527 = vsel %vm116, %v415, 0
    %529 = vmatpush.msra.mxu0 0.0
    %530 = vmatpush.msra.mxu0 0.0
    %531 = vmatpush.msra.mxu0 0.0
    %532 = vmatpush.msra.mxu0 0.0
    %533 = vmatpush.msra.mxu0 0.0
    %534 = vmatpush.msra.mxu0 0.0
    %535 = vmatpush.msra.mxu0 0.0
    %536 = vmatpush.msra.mxu0 0.0
    %537 = vmatpush.msra.mxu0 0.0
    %538 = vmatpush.msra.mxu0 0.0
    %539 = vmatpush.msra.mxu0 0.0
    %540 = vmatpush.msra.mxu0 0.0
    %541 = vmatpush.msra.mxu0 0.0
    %542 = vmatpush.msra.mxu0 0.0
    %543 = vmatpush.msra.mxu0 0.0
    %544 = vmatpush.msra.mxu0 %v524
    %545 = vmatmul.f32.gmra.mxu0 %v527
    %v546 = vpop.f32.mrf.mxu0
    %v547 = vadd.f32 0.0, %v546
    %548 = vdwg.mxu0
    %549 = vrot.lane.b32.xlu0 %v85, 64
    %v550 = vpop.permute.xlu0 %549
    %v553 = vsel %vm116, %v416, 0
    %555 = vmatpush.msra.mxu0 0.0
    %556 = vmatpush.msra.mxu0 0.0
    %557 = vmatpush.msra.mxu0 0.0
    %558 = vmatpush.msra.mxu0 0.0
    %559 = vmatpush.msra.mxu0 0.0
    %560 = vmatpush.msra.mxu0 0.0
    %561 = vmatpush.msra.mxu0 0.0
    %562 = vmatpush.msra.mxu0 0.0
    %563 = vmatpush.msra.mxu0 0.0
    %564 = vmatpush.msra.mxu0 0.0
    %565 = vmatpush.msra.mxu0 0.0
    %566 = vmatpush.msra.mxu0 0.0
    %567 = vmatpush.msra.mxu0 0.0
    %568 = vmatpush.msra.mxu0 0.0
    %569 = vmatpush.msra.mxu0 0.0
    %570 = vmatpush.msra.mxu0 %v550
    %571 = vmatmul.f32.gmra.mxu0 %v553
    %v572 = vpop.f32.mrf.mxu0
    %v573 = vadd.f32 0.0, %v572
    %574 = vdwg.mxu0
    %575 = vrot.lane.b32.xlu0 %v91, 64
    %v576 = vpop.permute.xlu0 %575
    %v579 = vsel %vm116, %v417, 0
    %581 = vmatpush.msra.mxu0 0.0
    %582 = vmatpush.msra.mxu0 0.0
    %583 = vmatpush.msra.mxu0 0.0
    %584 = vmatpush.msra.mxu0 0.0
    %585 = vmatpush.msra.mxu0 0.0
    %586 = vmatpush.msra.mxu0 0.0
    %587 = vmatpush.msra.mxu0 0.0
    %588 = vmatpush.msra.mxu0 0.0
    %589 = vmatpush.msra.mxu0 0.0
    %590 = vmatpush.msra.mxu0 0.0
    %591 = vmatpush.msra.mxu0 0.0
    %592 = vmatpush.msra.mxu0 0.0
    %593 = vmatpush.msra.mxu0 0.0
    %594 = vmatpush.msra.mxu0 0.0
    %595 = vmatpush.msra.mxu0 0.0
    %596 = vmatpush.msra.mxu0 %v576
    %597 = vmatmul.f32.gmra.mxu0 %v579
    %v598 = vpop.f32.mrf.mxu0
    %v599 = vadd.f32 0.0, %v598
    %600 = vdwg.mxu0
    %601 = vrot.lane.b32.xlu0 %v97, 64
    %v602 = vpop.permute.xlu0 %601
    %v605 = vsel %vm116, %v418, 0
    %607 = vmatpush.msra.mxu0 0.0
    %608 = vmatpush.msra.mxu0 0.0
    %609 = vmatpush.msra.mxu0 0.0
    %610 = vmatpush.msra.mxu0 0.0
    %611 = vmatpush.msra.mxu0 0.0
    %612 = vmatpush.msra.mxu0 0.0
    %613 = vmatpush.msra.mxu0 0.0
    %614 = vmatpush.msra.mxu0 0.0
    %615 = vmatpush.msra.mxu0 0.0
    %616 = vmatpush.msra.mxu0 0.0
    %617 = vmatpush.msra.mxu0 0.0
    %618 = vmatpush.msra.mxu0 0.0
    %619 = vmatpush.msra.mxu0 0.0
    %620 = vmatpush.msra.mxu0 0.0
    %621 = vmatpush.msra.mxu0 0.0
    %622 = vmatpush.msra.mxu0 %v602
    %623 = vmatmul.f32.gmra.mxu0 %v605
    %v624 = vpop.f32.mrf.mxu0
    %v625 = vadd.f32 0.0, %v624
    %626 = vdwg.mxu0
    %629 = vrot.lane.b32.xlu0 %v469, 8
    %v630 = vpop.permute.xlu0 %629
    %631 = vrot.lane.b32.xlu0 %v573, 8
    %v632 = vpop.permute.xlu0 %631
    %637 = vrot.lane.b32.xlu0 %v495, 16
    %v638 = vpop.permute.xlu0 %637
    %639 = vrot.lane.b32.xlu0 %v599, 16
    %v640 = vpop.permute.xlu0 %639
    %645 = vrot.lane.b32.xlu0 %v521, 24
    %v646 = vpop.permute.xlu0 %645
    %647 = vrot.lane.b32.xlu0 %v625, 24
    %v648 = vpop.permute.xlu0 %647
    %v651 = vsel %vm116, %v443, %v630
    %v652 = vsel %vm116, %v547, %v632
    %vm653 = vcmask 130048
    %v654 = vsel %vm653, %v651, %v638
    %v655 = vsel %vm653, %v652, %v640
    %vm656 = vcmask 195584
    %v657 = vsel %vm656, %v654, %v646
    %v658 = vsel %vm656, %v655, %v648
    %v659 = vld [vmem:[#allocation5 + $0x20] sm:$0xff]
    %v660 = vld [vmem:[#allocation5 + $0x28] sm:$0xff]
    %v661 = vld [vmem:[#allocation5 + $0x30] sm:$0xff]
    %v662 = vld [vmem:[#allocation5 + $0x38] sm:$0xff]
    %v663 = vld [vmem:[#allocation5 + $0x40] sm:$0x1]
    %v664 = vperm.slane %v663, 0
    %v666 = vsel %vm50, %v657, 0
    %v669 = vsel %vm50, %v658, 0
    %671 = vmatpush.msra.mxu0 0.0
    %672 = vmatpush.msra.mxu0 0.0
    %673 = vmatpush.msra.mxu0 0.0
    %674 = vmatpush.msra.mxu0 0.0
    %675 = vmatpush.msra.mxu0 0.0
    %676 = vmatpush.msra.mxu0 0.0
    %677 = vmatpush.msra.mxu0 0.0
    %678 = vmatpush.msra.mxu0 0.0
    %679 = vmatpush.msra.mxu0 0.0
    %680 = vmatpush.msra.mxu0 0.0
    %681 = vmatpush.msra.mxu0 0.0
    %682 = vmatpush.msra.mxu0 0.0
    %683 = vmatpush.msra.mxu0 %v662
    %684 = vmatpush.msra.mxu0 %v661
    %685 = vmatpush.msra.mxu0 %v660
    %686 = vmatpush.msra.mxu0 %v659
    %687 = vmatmul.f32.gmra.mxu0 %v666
    %v688 = vpop.f32.mrf.mxu0
    %v689 = vadd.f32 %v664, %v688
    %690 = vmatmul.f32.gmra.mxu0 %v669
    %v691 = vpop.f32.mrf.mxu0
    %v692 = vadd.f32 %v664, %v691
    %693 = vdwg.mxu0
    %v696 = vrot.slane %v689, 4
    %v697 = vrot.slane %v692, 4
    %v698 = vperm.slane %v689, 0
    %v699 = vperm.slane %v696, 0
    %v700 = vperm.slane %v692, 0
    %v701 = vperm.slane %v697, 0
    %vm702 = vcmask 1041409
    %v703 = vsel %vm702, %v699, %v698
    %vm704 = vcmask 1042434
    %v705 = vsel %vm704, %v700, %v703
    %vm706 = vcmask 1043459
    %v707 = vsel %vm706, %v701, %v705
    %v709 = vperm.slane %v689, 1
    %v710 = vperm.slane %v696, 1
    %v711 = vperm.slane %v692, 1
    %v712 = vperm.slane %v697, 1
    %v713 = vsel %vm702, %v710, %v709
    %v714 = vsel %vm704, %v711, %v713
    %v715 = vsel %vm706, %v712, %v714
    %716 = vrot.lane.b32.xlu0 %v715, 32
    %v717 = vpop.permute.xlu0 %716
    %v719 = vperm.slane %v689, 2
    %v720 = vperm.slane %v696, 2
    %v721 = vperm.slane %v692, 2
    %v722 = vperm.slane %v697, 2
    %v723 = vsel %vm702, %v720, %v719
    %v724 = vsel %vm704, %v721, %v723
    %v725 = vsel %vm706, %v722, %v724
    %726 = vrot.lane.b32.xlu0 %v725, 64
    %v727 = vpop.permute.xlu0 %726
    %v729 = vperm.slane %v689, 3
    %v730 = vperm.slane %v696, 3
    %v731 = vperm.slane %v692, 3
    %v732 = vperm.slane %v697, 3
    %v733 = vsel %vm702, %v730, %v729
    %v734 = vsel %vm704, %v731, %v733
    %v735 = vsel %vm706, %v732, %v734
    %736 = vrot.lane.b32.xlu0 %v735, 96
    %v737 = vpop.permute.xlu0 %736
    %v739 = vsel %vm50, %v707, %v717
    %vm740 = vcmask 523264
    %v741 = vsel %vm740, %v739, %v727
    %vm742 = vcmask 785408
    %v743 = vsel %vm742, %v741, %v737
    %744 = vst [vmem:[#allocation7] sm:$0xf] %v743
    // Predicated region
    $region18: #{tpu_custom_call.1} parent=1 // pred_check
      _
    $region19: #{tpu_custom_call.1} parent=1 // pred_check_branch
      %746 = sbr.rel (0) target = $region21
    $region20: #{tpu_custom_call.1} parent=1 // pred_region
      %748 = vsyncadd [#allocation4], 0
      %s750 = sshll.u32 [#allocation7], 4
      %s751 = int_to_ptr.vmem [resolvable:$true] %s750
      %s752 = sshll.u32 %s2, 4
      %s753 = int_to_ptr.hbm [resolvable:$true] %s752
      %755 = dma.vmem_to_hbm [thread:$0]  %s751, 64, %s753, [#allocation4]
    $region21: #{tpu_custom_call.1} parent=1 // pred_fallthru
      _
    // Predicated region
    $region22: #{tpu_custom_call.1} parent=1 // pred_check
      _
    $region23: #{tpu_custom_call.1} parent=1 // pred_check_branch
      %757 = sbr.rel (0) target = $region25
    $region24: #{tpu_custom_call.1} parent=1 // pred_region
      %759 = dma.done [#allocation4], 64
    $region25: #{tpu_custom_call.1} parent=1 // pred_fallthru
      _
    %760 = vsyncpa [#allocation3], 1
    %761 = vsyncpa [#allocation6], 1
    %762 = vsyncpa [#allocation4], 1

</llo_original>
